<compile_context>
chip_gen: v7x
topology: tpu7x:2x2x1
jax: 0.10.0
libtpu: 0.0.40
codegen_flags: <defaults>
</compile_context>

<pallas_src>
import functools

import jax
import jax.numpy as jnp
from jax import lax
from jax.experimental import pallas as pl
from jax.experimental.pallas import tpu as pltpu

LANE = 128
CHUNK_ROWS = 1024          # rows processed per inner step: bounds VMEM temporaries (~0.5 MiB each)
MAX_BLOCK_ROWS = 8192      # rows per DMA block: 8192 x 128 f32 = 4 MiB per input per buffer
NUM_CORE_SPLITS = 2        # leading "parallel" grid axis -> both TensorCores on v7x
NUM_SUMS = 6               # sum(t), sum(bce), sum(t*bce), TP, FN, FP


def _round_up(a, b):
    return -(-a // b) * b


def _sublane_multiple(dtype):
    # Sub-32-bit dtypes pack along sublanes: f32 -> 8, bf16 -> 16, int8/bool -> 32.
    return max(8, 32 // jnp.dtype(dtype).itemsize)


def _make_kernel(rows, block_rows, chunk_rows, blocks_per_split, needs_mask):
    n_chunks = block_rows // chunk_rows

    def kernel(x_ref, t_ref, o_ref):
        c = pl.program_id(0)      # core split (parallel)
        i = pl.program_id(1)      # reduction step within the split (arbitrary)

        @pl.when(i == 0)
        def _():
            o_ref[...] = jnp.zeros_like(o_ref)

        # Logical (unclamped) block index: the index_map clamps the DMA window in-bounds;
        # the row mask below zeroes any rows that lie beyond the real array.
        blk = c * blocks_per_split + i
        base_remaining = rows - blk * block_rows

        def process_chunk(j):
            r0 = pl.multiple_of(j * chunk_rows, chunk_rows)
            x = x_ref[pl.ds(r0, chunk_rows), :].astype(jnp.float32)  # probs in (0, 1)
            t = t_ref[pl.ds(r0, chunk_rows), :].astype(jnp.float32)  # binary {0, 1}

            if needs_mask:
                row_idx = lax.broadcasted_iota(jnp.int32, (chunk_rows, LANE), 0)
                valid = row_idx < (base_remaining - j * chunk_rows)
                x = jnp.where(valid, x, 0.0)
                t = jnp.where(valid, t, 0.0)

            # t is a binary mask, so -(t*log(x) + (1-t)*log(1-x)) == -clamp(log(t?x:1-x), -100)
            # (matches the per-term clamp of torch.nn.functional.binary_cross_entropy).
            bce = -jnp.maximum(jnp.log(jnp.where(t > 0.5, x, 1.0 - x)), -100.0)
            tx = t * x

            def fold(v):
                # VPU-only partial reduction: (chunk_rows, 128) -> (8, 128)
                return jnp.sum(v.reshape(-1, 8, LANE), axis=0)

            o_ref[0, 0] = o_ref[0, 0] + fold(t)        # sum(target)
            o_ref[0, 1] = o_ref[0, 1] + fold(bce)      # sum(bce)
            o_ref[0, 2] = o_ref[0, 2] + fold(t * bce)  # sum(target * bce)
            o_ref[0, 3] = o_ref[0, 3] + fold(tx)       # true positives
            o_ref[0, 4] = o_ref[0, 4] + fold(t - tx)   # false negatives: t * (1 - x)
            o_ref[0, 5] = o_ref[0, 5] + fold(x - tx)   # false positives: (1 - t) * x

        def body(j, carry):
            process_chunk(j)
            return carry

        lax.fori_loop(0, n_chunks, body, 0, unroll=False)

    return kernel


@functools.partial(jax.jit, static_argnames=("smooth", "alpha", "gamma"))
def combo_loss_focal(x, target, *, smooth=1.0, alpha=0.9, gamma=1.0):
    """x: (N, 1, H, W) probabilities; target: (N, H, W) binary mask (any dtype). Scalar loss."""
    N, C, H, W = x.shape
    assert C == 1, "PyTorch reference indexes input[:, 0] (single channel)"
    n = N * H * W

    xf = x.reshape(-1)        # stream in original dtype; cast to f32 inside the kernel
    tf = target.reshape(-1)

    # Only lane alignment may need a pad (rare for image shapes; zero pads contribute 0).
    n_lane = _round_up(n, LANE)
    if n_lane != n:
        # TODO(synk): a 1-D block layout would avoid even this copy; negligible in practice.
        xf = jnp.pad(xf, (0, n_lane - n))
        tf = jnp.pad(tf, (0, n_lane - n))
    rows = n_lane // LANE

    mult = max(_sublane_multiple(xf.dtype), _sublane_multiple(tf.dtype))
    if rows <= CHUNK_ROWS:
        block_rows = _round_up(rows, mult)
        chunk_rows = block_rows
    else:
        block_rows = min(MAX_BLOCK_ROWS, _round_up(rows, CHUNK_ROWS))
        chunk_rows = CHUNK_ROWS

    total_blocks = pl.cdiv(rows, block_rows)
    blocks_per_split = pl.cdiv(total_blocks, NUM_CORE_SPLITS)
    needs_mask = (NUM_CORE_SPLITS * blocks_per_split * block_rows) != rows

    xp = xf.reshape(rows, LANE)
    tp2 = tf.reshape(rows, LANE)

    def in_map(c, i):
        # Clamp so duplicated / overhanging block windows stay in-bounds; the in-kernel
        # row mask (driven by the unclamped index) zeroes their contribution.
        return (jnp.minimum(c * blocks_per_split + i, total_blocks - 1), 0)

    kernel = _make_kernel(rows, block_rows, chunk_rows, blocks_per_split, needs_mask)

    partials = pl.pallas_call(
        kernel,
        out_shape=jax.ShapeDtypeStruct((NUM_CORE_SPLITS, NUM_SUMS, 8, LANE), jnp.float32),
        grid=(NUM_CORE_SPLITS, blocks_per_split),
        in_specs=[
            pl.BlockSpec((block_rows, LANE), in_map),
            pl.BlockSpec((block_rows, LANE), in_map),
        ],
        out_specs=pl.BlockSpec((1, NUM_SUMS, 8, LANE), lambda c, i: (c, 0, 0, 0)),
        compiler_params=pltpu.CompilerParams(
            dimension_semantics=("parallel", "arbitrary"),
            vmem_limit_bytes=32 * 1024 * 1024,
        ),
    )(xp, tp2)

    # Tiny finalize on the combined per-core partials (plain JAX, negligible).
    sums = jnp.sum(partials, axis=(0, 2, 3))            # (6,)
    s_t, s_bce, s_tbce, tp, fn, fp = (sums[k] for k in range(NUM_SUMS))

    n_f = jnp.float32(n)
    beta = 1.0 - s_t / n_f
    # mean(weights * bce) with weights = (1 - beta) + (2*beta - 1) * target
    loss1 = ((1.0 - beta) * s_bce + (2.0 * beta - 1.0) * s_tbce) / n_f

    tversky = (tp + smooth) / (tp + alpha * fn + (1.0 - alpha) * fp + smooth)
    one_minus_tv = 1.0 - tversky
    loss2 = one_minus_tv if gamma == 1.0 else one_minus_tv ** gamma
    return 10.0 * loss1 + loss2


def _reference_loss(x, target, smooth=1.0, alpha=0.9, gamma=1.0):
    t = target.astype(jnp.float32)
    xin = x[:, 0, :, :].astype(jnp.float32)
    beta = 1.0 - jnp.mean(t)
    weights = 1.0 - beta + (2.0 * beta - 1.0) * t
    log_x = jnp.maximum(jnp.log(xin), -100.0)
    log_1mx = jnp.maximum(jnp.log(1.0 - xin), -100.0)
    bce = -(t * log_x + (1.0 - t) * log_1mx)
    loss1 = jnp.mean(weights * bce)

    t_pos = t.reshape(-1)
    i_pos = x.astype(jnp.float32).reshape(-1)
    tp = jnp.sum(t_pos * i_pos)
    fn = jnp.sum(t_pos * (1.0 - i_pos))
    fp = jnp.sum((1.0 - t_pos) * i_pos)
    tversky = (tp + smooth) / (tp + alpha * fn + (1.0 - alpha) * fp + smooth)
    loss2 = (1.0 - tversky) ** gamma
    return 10.0 * loss1 + loss2


if __name__ == "__main__":
    key = jax.random.PRNGKey(0)
    k1, k2 = jax.random.split(key)

    N, C, H, W = 2, 1, 32, 32
    # predictions are probabilities in (0, 1), as F.binary_cross_entropy requires
    x = jax.nn.sigmoid(jax.random.normal(k1, (N, C, H, W), dtype=jnp.float32))
    # binary mask streamed in a narrow dtype ({0, 1} is exact in bf16)
    target = jax.random.bernoulli(k2, p=0.3, shape=(N, H, W)).astype(jnp.bfloat16)

    loss = combo_loss_focal(x, target)
    loss = jax.block_until_ready(loss)

    ref = _reference_loss(x, target)
    assert jnp.allclose(loss, ref, rtol=1e-5, atol=1e-5), (loss, ref)

    print("KERNEL_OK")
</pallas_src>

<mosaic_0001>
module attributes {stable_mosaic.version = 11 : i64} {
  func.func @kernel(%arg0: i32, %arg1: i32, %arg2: memref<16x128xf32, #tpu.memory_space<vmem>>, %arg3: memref<16x128xbf16, #tpu.memory_space<vmem>>, %arg4: memref<1x6x8x128xf32, #tpu.memory_space<vmem>>) attributes {dimension_semantics = [#tpu.dimension_semantics<parallel>, #tpu.dimension_semantics<arbitrary>], iteration_bounds = array<i64: 2, 1>, scalar_prefetch = 0 : i64, scratch_operands = 0 : i64, tpu.core_type = #tpu.core_type<tc>, window_params = [{transform_indices = @transform_0, window_bounds = array<i64: 16, 128>}, {transform_indices = @transform_1, window_bounds = array<i64: 16, 128>}, {transform_indices = @transform_2, window_bounds = array<i64: 1, 6, 8, 128>}]} {
    %c0_i32 = arith.constant 0 : i32
    %0 = arith.cmpi eq, %arg1, %c0_i32 : i32
    %1 = arith.extui %0 : i1 to i32
    %c0_i32_0 = arith.constant 0 : i32
    %2 = arith.cmpi ne, %1, %c0_i32_0 : i32
    scf.if %2 {
      %cst_61 = arith.constant 0.000000e+00 : f32
      %85 = vector.broadcast %cst_61 : f32 to vector<1x6x8x128xf32>
      %c0_62 = arith.constant 0 : index
      %c0_63 = arith.constant 0 : index
      %c0_64 = arith.constant 0 : index
      %c0_65 = arith.constant 0 : index
      %86 = vector.load %arg4[%c0_62, %c0_63, %c0_64, %c0_65] : memref<1x6x8x128xf32, #tpu.memory_space<vmem>>, vector<1x6x8x128xf32>
      tpu.vector_store %arg4[%c0_62, %c0_63, %c0_64, %c0_65], %85 {strides = array<i32>} : memref<1x6x8x128xf32, #tpu.memory_space<vmem>>, vector<1x6x8x128xf32>,
    } else {
    }
    %c1_i32 = arith.constant 1 : i32
    %3 = arith.muli %arg0, %c1_i32 : i32
    %4 = arith.addi %3, %arg1 : i32
    %c16_i32 = arith.constant 16 : i32
    %5 = arith.muli %4, %c16_i32 : i32
    %c16_i32_1 = arith.constant 16 : i32
    %6 = arith.subi %c16_i32_1, %5 : i32
    %c0_i32_2 = arith.constant 0 : i32
    %c16_i32_3 = arith.constant 16 : i32
    %7 = arith.muli %c0_i32_2, %c16_i32_3 : i32
    %8 = tpu.assume_multiple %7, 16 : i32
    %9 = arith.index_cast %8 : i32 to index
    %c0 = arith.constant 0 : index
    %10 = vector.load %arg2[%9, %c0] : memref<16x128xf32, #tpu.memory_space<vmem>>, vector<16x128xf32>
    %11 = arith.index_cast %8 : i32 to index
    %c0_4 = arith.constant 0 : index
    %12 = vector.load %arg3[%11, %c0_4] : memref<16x128xbf16, #tpu.memory_space<vmem>>, vector<16x128xbf16>
    %13 = arith.extf %12 : vector<16x128xbf16> to vector<16x128xf32>
    %14 = tpu.iota {dimensions = array<i32: 0>} : vector<16x128xi32>
    %c16_i32_5 = arith.constant 16 : i32
    %15 = arith.muli %c0_i32_2, %c16_i32_5 : i32
    %16 = arith.subi %6, %15 : i32
    %17 = vector.broadcast %16 : i32 to vector<16x128xi32>
    %18 = arith.cmpi slt, %14, %17 : vector<16x128xi32>
    %cst = arith.constant 0.000000e+00 : f32
    %19 = vector.broadcast %cst : f32 to vector<16x128xf32>
    %20 = arith.select %18, %10, %19 : vector<16x128xi1>, vector<16x128xf32>
    %cst_6 = arith.constant 0.000000e+00 : f32
    %21 = vector.broadcast %cst_6 : f32 to vector<16x128xf32>
    %22 = arith.select %18, %13, %21 : vector<16x128xi1>, vector<16x128xf32>
    %cst_7 = arith.constant 5.000000e-01 : f32
    %23 = vector.broadcast %cst_7 : f32 to vector<16x128xf32>
    %24 = arith.cmpf ogt, %22, %23 : vector<16x128xf32>
    %cst_8 = arith.constant 1.000000e+00 : f32
    %25 = vector.broadcast %cst_8 : f32 to vector<16x128xf32>
    %26 = arith.subf %25, %20 : vector<16x128xf32>
    %27 = arith.select %24, %20, %26 : vector<16x128xi1>, vector<16x128xf32>
    %28 = math.log %27 : vector<16x128xf32>
    %cst_9 = arith.constant -1.000000e+02 : f32
    %29 = vector.broadcast %cst_9 : f32 to vector<16x128xf32>
    %30 = arith.maximumf %28, %29 : vector<16x128xf32>
    %cst_10 = arith.constant 0.000000e+00 : f32
    %31 = vector.broadcast %cst_10 : f32 to vector<16x128xf32>
    %32 = arith.subf %31, %30 : vector<16x128xf32>
    %33 = arith.mulf %22, %20 : vector<16x128xf32>
    %c0_11 = arith.constant 0 : index
    %c0_12 = arith.constant 0 : index
    %c0_13 = arith.constant 0 : index
    %c0_14 = arith.constant 0 : index
    %34 = vector.load %arg4[%c0_11, %c0_12, %c0_13, %c0_14] : memref<1x6x8x128xf32, #tpu.memory_space<vmem>>, vector<1x1x8x128xf32>
    %35 = vector.shape_cast %34 : vector<1x1x8x128xf32> to vector<8x128xf32>
    %36 = vector.shape_cast %22 : vector<16x128xf32> to vector<2x8x128xf32>
    %cst_15 = arith.constant dense<0.000000e+00> : vector<8x128xf32>
    %37 = vector.multi_reduction <add>, %36, %cst_15 [0] : vector<2x8x128xf32> to vector<8x128xf32>
    %38 = arith.addf %35, %37 : vector<8x128xf32>
    %c0_16 = arith.constant 0 : index
    %c0_17 = arith.constant 0 : index
    %c0_18 = arith.constant 0 : index
    %c0_19 = arith.constant 0 : index
    %39 = vector.load %arg4[%c0_16, %c0_17, %c0_18, %c0_19] : memref<1x6x8x128xf32, #tpu.memory_space<vmem>>, vector<1x1x8x128xf32>
    %40 = vector.shape_cast %39 : vector<1x1x8x128xf32> to vector<8x128xf32>
    %41 = vector.shape_cast %38 : vector<8x128xf32> to vector<1x1x8x128xf32>
    tpu.vector_store %arg4[%c0_16, %c0_17, %c0_18, %c0_19], %41 {strides = array<i32>} : memref<1x6x8x128xf32, #tpu.memory_space<vmem>>, vector<1x1x8x128xf32>,
    %c0_20 = arith.constant 0 : index
    %c1 = arith.constant 1 : index
    %c0_21 = arith.constant 0 : index
    %c0_22 = arith.constant 0 : index
    %42 = vector.load %arg4[%c0_20, %c1, %c0_21, %c0_22] : memref<1x6x8x128xf32, #tpu.memory_space<vmem>>, vector<1x1x8x128xf32>
    %43 = vector.shape_cast %42 : vector<1x1x8x128xf32> to vector<8x128xf32>
    %44 = vector.shape_cast %32 : vector<16x128xf32> to vector<2x8x128xf32>
    %cst_23 = arith.constant dense<0.000000e+00> : vector<8x128xf32>
    %45 = vector.multi_reduction <add>, %44, %cst_23 [0] : vector<2x8x128xf32> to vector<8x128xf32>
    %46 = arith.addf %43, %45 : vector<8x128xf32>
    %c0_24 = arith.constant 0 : index
    %c1_25 = arith.constant 1 : index
    %c0_26 = arith.constant 0 : index
    %c0_27 = arith.constant 0 : index
    %47 = vector.load %arg4[%c0_24, %c1_25, %c0_26, %c0_27] : memref<1x6x8x128xf32, #tpu.memory_space<vmem>>, vector<1x1x8x128xf32>
    %48 = vector.shape_cast %47 : vector<1x1x8x128xf32> to vector<8x128xf32>
    %49 = vector.shape_cast %46 : vector<8x128xf32> to vector<1x1x8x128xf32>
    tpu.vector_store %arg4[%c0_24, %c1_25, %c0_26, %c0_27], %49 {strides = array<i32>} : memref<1x6x8x128xf32, #tpu.memory_space<vmem>>, vector<1x1x8x128xf32>,
    %c0_28 = arith.constant 0 : index
    %c2 = arith.constant 2 : index
    %c0_29 = arith.constant 0 : index
    %c0_30 = arith.constant 0 : index
    %50 = vector.load %arg4[%c0_28, %c2, %c0_29, %c0_30] : memref<1x6x8x128xf32, #tpu.memory_space<vmem>>, vector<1x1x8x128xf32>
    %51 = vector.shape_cast %50 : vector<1x1x8x128xf32> to vector<8x128xf32>
    %52 = arith.mulf %22, %32 : vector<16x128xf32>
    %53 = vector.shape_cast %52 : vector<16x128xf32> to vector<2x8x128xf32>
    %cst_31 = arith.constant dense<0.000000e+00> : vector<8x128xf32>
    %54 = vector.multi_reduction <add>, %53, %cst_31 [0] : vector<2x8x128xf32> to vector<8x128xf32>
    %55 = arith.addf %51, %54 : vector<8x128xf32>
    %c0_32 = arith.constant 0 : index
    %c2_33 = arith.constant 2 : index
    %c0_34 = arith.constant 0 : index
    %c0_35 = arith.constant 0 : index
    %56 = vector.load %arg4[%c0_32, %c2_33, %c0_34, %c0_35] : memref<1x6x8x128xf32, #tpu.memory_space<vmem>>, vector<1x1x8x128xf32>
    %57 = vector.shape_cast %56 : vector<1x1x8x128xf32> to vector<8x128xf32>
    %58 = vector.shape_cast %55 : vector<8x128xf32> to vector<1x1x8x128xf32>
    tpu.vector_store %arg4[%c0_32, %c2_33, %c0_34, %c0_35], %58 {strides = array<i32>} : memref<1x6x8x128xf32, #tpu.memory_space<vmem>>, vector<1x1x8x128xf32>,
    %c0_36 = arith.constant 0 : index
    %c3 = arith.constant 3 : index
    %c0_37 = arith.constant 0 : index
    %c0_38 = arith.constant 0 : index
    %59 = vector.load %arg4[%c0_36, %c3, %c0_37, %c0_38] : memref<1x6x8x128xf32, #tpu.memory_space<vmem>>, vector<1x1x8x128xf32>
    %60 = vector.shape_cast %59 : vector<1x1x8x128xf32> to vector<8x128xf32>
    %61 = vector.shape_cast %33 : vector<16x128xf32> to vector<2x8x128xf32>
    %cst_39 = arith.constant dense<0.000000e+00> : vector<8x128xf32>
    %62 = vector.multi_reduction <add>, %61, %cst_39 [0] : vector<2x8x128xf32> to vector<8x128xf32>
    %63 = arith.addf %60, %62 : vector<8x128xf32>
    %c0_40 = arith.constant 0 : index
    %c3_41 = arith.constant 3 : index
    %c0_42 = arith.constant 0 : index
    %c0_43 = arith.constant 0 : index
    %64 = vector.load %arg4[%c0_40, %c3_41, %c0_42, %c0_43] : memref<1x6x8x128xf32, #tpu.memory_space<vmem>>, vector<1x1x8x128xf32>
    %65 = vector.shape_cast %64 : vector<1x1x8x128xf32> to vector<8x128xf32>
    %66 = vector.shape_cast %63 : vector<8x128xf32> to vector<1x1x8x128xf32>
    tpu.vector_store %arg4[%c0_40, %c3_41, %c0_42, %c0_43], %66 {strides = array<i32>} : memref<1x6x8x128xf32, #tpu.memory_space<vmem>>, vector<1x1x8x128xf32>,
    %c0_44 = arith.constant 0 : index
    %c4 = arith.constant 4 : index
    %c0_45 = arith.constant 0 : index
    %c0_46 = arith.constant 0 : index
    %67 = vector.load %arg4[%c0_44, %c4, %c0_45, %c0_46] : memref<1x6x8x128xf32, #tpu.memory_space<vmem>>, vector<1x1x8x128xf32>
    %68 = vector.shape_cast %67 : vector<1x1x8x128xf32> to vector<8x128xf32>
    %69 = arith.subf %22, %33 : vector<16x128xf32>
    %70 = vector.shape_cast %69 : vector<16x128xf32> to vector<2x8x128xf32>
    %cst_47 = arith.constant dense<0.000000e+00> : vector<8x128xf32>
    %71 = vector.multi_reduction <add>, %70, %cst_47 [0] : vector<2x8x128xf32> to vector<8x128xf32>
    %72 = arith.addf %68, %71 : vector<8x128xf32>
    %c0_48 = arith.constant 0 : index
    %c4_49 = arith.constant 4 : index
    %c0_50 = arith.constant 0 : index
    %c0_51 = arith.constant 0 : index
    %73 = vector.load %arg4[%c0_48, %c4_49, %c0_50, %c0_51] : memref<1x6x8x128xf32, #tpu.memory_space<vmem>>, vector<1x1x8x128xf32>
    %74 = vector.shape_cast %73 : vector<1x1x8x128xf32> to vector<8x128xf32>
    %75 = vector.shape_cast %72 : vector<8x128xf32> to vector<1x1x8x128xf32>
    tpu.vector_store %arg4[%c0_48, %c4_49, %c0_50, %c0_51], %75 {strides = array<i32>} : memref<1x6x8x128xf32, #tpu.memory_space<vmem>>, vector<1x1x8x128xf32>,
    %c0_52 = arith.constant 0 : index
    %c5 = arith.constant 5 : index
    %c0_53 = arith.constant 0 : index
    %c0_54 = arith.constant 0 : index
    %76 = vector.load %arg4[%c0_52, %c5, %c0_53, %c0_54] : memref<1x6x8x128xf32, #tpu.memory_space<vmem>>, vector<1x1x8x128xf32>
    %77 = vector.shape_cast %76 : vector<1x1x8x128xf32> to vector<8x128xf32>
    %78 = arith.subf %20, %33 : vector<16x128xf32>
    %79 = vector.shape_cast %78 : vector<16x128xf32> to vector<2x8x128xf32>
    %cst_55 = arith.constant dense<0.000000e+00> : vector<8x128xf32>
    %80 = vector.multi_reduction <add>, %79, %cst_55 [0] : vector<2x8x128xf32> to vector<8x128xf32>
    %81 = arith.addf %77, %80 : vector<8x128xf32>
    %c0_56 = arith.constant 0 : index
    %c5_57 = arith.constant 5 : index
    %c0_58 = arith.constant 0 : index
    %c0_59 = arith.constant 0 : index
    %82 = vector.load %arg4[%c0_56, %c5_57, %c0_58, %c0_59] : memref<1x6x8x128xf32, #tpu.memory_space<vmem>>, vector<1x1x8x128xf32>
    %83 = vector.shape_cast %82 : vector<1x1x8x128xf32> to vector<8x128xf32>
    %84 = vector.shape_cast %81 : vector<8x128xf32> to vector<1x1x8x128xf32>
    tpu.vector_store %arg4[%c0_56, %c5_57, %c0_58, %c0_59], %84 {strides = array<i32>} : memref<1x6x8x128xf32, #tpu.memory_space<vmem>>, vector<1x1x8x128xf32>,
    %c1_i32_60 = arith.constant 1 : i32
    return
  }
  func.func @transform_0(%arg0: i32, %arg1: i32) -> (i32, i32) {
    %c1_i32 = arith.constant 1 : i32
    %0 = arith.muli %arg0, %c1_i32 : i32
    %1 = arith.addi %0, %arg1 : i32
    %c0_i32 = arith.constant 0 : i32
    %2 = arith.minsi %1, %c0_i32 : i32
    %c0_i32_0 = arith.constant 0 : i32
    %c0_i32_1 = arith.constant 0 : i32
    return %2, %c0_i32_0 : i32, i32
  }
  func.func @transform_1(%arg0: i32, %arg1: i32) -> (i32, i32) {
    %c1_i32 = arith.constant 1 : i32
    %0 = arith.muli %arg0, %c1_i32 : i32
    %1 = arith.addi %0, %arg1 : i32
    %c0_i32 = arith.constant 0 : i32
    %2 = arith.minsi %1, %c0_i32 : i32
    %c0_i32_0 = arith.constant 0 : i32
    %c0_i32_1 = arith.constant 0 : i32
    return %2, %c0_i32_0 : i32, i32
  }
  func.func @transform_2(%arg0: i32, %arg1: i32) -> (i32, i32, i32, i32) {
    %c0_i32 = arith.constant 0 : i32
    %c0_i32_0 = arith.constant 0 : i32
    %c0_i32_1 = arith.constant 0 : i32
    %c0_i32_2 = arith.constant 0 : i32
    return %arg0, %c0_i32, %c0_i32_0, %c0_i32_1 : i32, i32, i32, i32
  }
}

</mosaic_0001>

<llo_original>
// kernel: combo_loss_focal.1
$region0: #{combo_loss_focal.1}
  #allocation0 [shape = 'u32[]', space=smem, size = 0x4, offset = 0x4, fixed_abs, tag = 'smem constant byte address 0x4 - core index']
  #allocation1 [shape = 'u32[144,128]{1,0:T(1,128)}', space=vmem, size = 0x12000, scoped, tag = 'internal scratch']
  %s0 = inlined_call_operand.vmem [shape: f32[16,128], index: 0, kind: input, shape index: {}]
  %s1 = inlined_call_operand.vmem [shape: bf16[16,128], index: 1, kind: input, shape index: {}]
  %s2 = inlined_call_operand.vmem [shape: f32[2,6,8,128], index: 2, kind: output, shape index: {}]
  %s3 = sld [smem:[#allocation0]]
  $region45: #{combo_loss_focal.1} parent=0
    _
  %s5 = ssub.s32 1, %s3
  %s6 = scalar_select 0, %s5, %s3
  loop: start=0, step=1, limit=4
  $region2: #{combo_loss_focal.1} parent=0 // loop_pre_header
    _
  $region3: #{combo_loss_focal.1} parent=0 // loop_header
    %s8 = sphi 0, %s12
    %p9 = scmp.ge.s32.totalorder %s8, 4
    %s15 = sphi 0, %s27
    %s16 = sphi 0, %s23
    %s17 = sphi 0, %s15
    %s18 = sphi 0, %s16
    %s19 = sphi 0, %s17
    %s20 = sphi 0, %s18
    %s36 = sphi 0, %s38
    %s39 = sphi 0, %s36
    %s40 = sphi 0, %s39
    %s56 = sphi 0, %s40
    %s68 = sphi 0, %s70
    %s71 = sphi 0, %s68
    %s72 = sphi 0, %s71
    %s88 = sphi 0, %s72
    %s94 = sphi 0, %s96
    %s97 = sphi 0, %s94
    %s98 = sphi 0, %s97
    %s114 = sphi 0, %s98
  $region4: #{combo_loss_focal.1} parent=0 // loop_header_branch
    %11 = sbr.rel (%p9) target = $region8
  $region5: #{combo_loss_focal.1} parent=0 // loop_body
    %s13 = ssub.s32 %s8, 1
    %s14 = ssub.s32 %s8, 2
    %s21 = sadd.s32 1, %s16
    %p22 = scmp.ge.s32.totalorder %s21, 1
    %s23 = scalar_select %p22, 0, %s21
    %s24 = sadd.s32 1, %s15
    %s25 = scalar_select %p22, %s24, %s15
    %p26 = scmp.ge.s32.totalorder %s25, 2
    %s27 = scalar_select %p26, 0, %s25
    %s28 = sadd.s32 %s15, %s16
    %p29 = scmp.lt.s32.totalorder %s28, 0
    %s30 = scalar_select %p29, %s28, 0
    %s31 = sadd.s32 %s27, %s23
    %p32 = scmp.lt.s32.totalorder %s31, 0
    %s33 = scalar_select %p32, %s31, 0
    %s34 = ssub.s32 %s30, %s33
    %p35 = scmp.eq.s32.totalorder %s34, 0
    %s37 = sadd.s32 %s36, 1
    %s38 = scalar_select %p35, %s36, %s37
    %p41 = pneg %p35
    %p42 = scmp.eq.s32.totalorder %s8, 1
    %p43 = por %p41, %p42
    %p44 = scmp.ne.s32.totalorder %s36, %s39
    %p45 = scmp.eq.s32.totalorder %s8, 0
    %p46 = por %p44, %p45
    %p47 = scmp.ne.s32.totalorder %s36, %s39
    %p48 = scmp.eq.s32.totalorder %s13, 1
    %p49 = por %p47, %p48
    %p50 = scmp.ne.s32.totalorder %s39, %s40
    %p51 = scmp.eq.s32.totalorder %s13, 0
    %p52 = por %p50, %p51
    %p53 = scmp.ne.s32.totalorder %s39, %s40
    %p54 = scmp.eq.s32.totalorder %s14, 1
    %p55 = por %p53, %p54
    %p57 = scmp.ne.s32.totalorder %s40, %s56
    %p58 = scmp.eq.s32.totalorder %s14, 0
    %p59 = por %p57, %p58
    %s60 = sadd.s32 %s15, %s16
    %p61 = scmp.lt.s32.totalorder %s60, 0
    %s62 = scalar_select %p61, %s60, 0
    %s63 = sadd.s32 %s27, %s23
    %p64 = scmp.lt.s32.totalorder %s63, 0
    %s65 = scalar_select %p64, %s63, 0
    %s66 = ssub.s32 %s62, %s65
    %p67 = scmp.eq.s32.totalorder %s66, 0
    %s69 = sadd.s32 %s68, 1
    %s70 = scalar_select %p67, %s68, %s69
    %p73 = pneg %p67
    %p74 = scmp.eq.s32.totalorder %s8, 1
    %p75 = por %p73, %p74
    %p76 = scmp.ne.s32.totalorder %s68, %s71
    %p77 = scmp.eq.s32.totalorder %s8, 0
    %p78 = por %p76, %p77
    %p79 = scmp.ne.s32.totalorder %s68, %s71
    %p80 = scmp.eq.s32.totalorder %s13, 1
    %p81 = por %p79, %p80
    %p82 = scmp.ne.s32.totalorder %s71, %s72
    %p83 = scmp.eq.s32.totalorder %s13, 0
    %p84 = por %p82, %p83
    %p85 = scmp.ne.s32.totalorder %s71, %s72
    %p86 = scmp.eq.s32.totalorder %s14, 1
    %p87 = por %p85, %p86
    %p89 = scmp.ne.s32.totalorder %s72, %s88
    %p90 = scmp.eq.s32.totalorder %s14, 0
    %p91 = por %p89, %p90
    %s92 = ssub.s32 %s15, %s27
    %p93 = scmp.eq.s32.totalorder %s92, 0
    %s95 = sadd.s32 %s94, 1
    %s96 = scalar_select %p93, %s94, %s95
    %p99 = pneg %p93
    %p100 = scmp.eq.s32.totalorder %s8, 1
    %p101 = por %p99, %p100
    %p102 = scmp.ne.s32.totalorder %s94, %s97
    %p103 = scmp.eq.s32.totalorder %s8, 0
    %p104 = por %p102, %p103
    %p105 = scmp.ne.s32.totalorder %s94, %s97
    %p106 = scmp.eq.s32.totalorder %s13, 1
    %p107 = por %p105, %p106
    %p108 = scmp.ne.s32.totalorder %s97, %s98
    %p109 = scmp.eq.s32.totalorder %s13, 0
    %p110 = por %p108, %p109
    %p111 = scmp.ne.s32.totalorder %s97, %s98
    %p112 = scmp.eq.s32.totalorder %s14, 1
    %p113 = por %p111, %p112
    %p115 = scmp.ne.s32.totalorder %s98, %s114
    %p116 = scmp.eq.s32.totalorder %s14, 0
    %p117 = por %p115, %p116
    %p118 = scmp.le.s32.totalorder 1, %s8
    %p119 = scmp.lt.s32.totalorder %s8, 3
    %p120 = pnand %p118, %p119
    %p121 = pneg %p120
    // Predicated region
    $region9: #{combo_loss_focal.1} parent=5 // pred_check
      _
    $region10: #{combo_loss_focal.1} parent=5 // pred_check_branch
      %123 = sbr.rel (%p120) target = $region12
    $region11: #{combo_loss_focal.1} parent=5 // pred_region
      %s124 = ssub.s32 %s8, 1
    $region12: #{combo_loss_focal.1} parent=5 // pred_fallthru
      _
    %p125 = scmp.lt.s32.totalorder %s8, 2
    // Predicated region
    $region13: #{combo_loss_focal.1} parent=5 // pred_check
      %p126 = pneg %p125
    $region14: #{combo_loss_focal.1} parent=5 // pred_check_branch
      %128 = sbr.rel (%p126) target = $region16
    $region15: #{combo_loss_focal.1} parent=5 // pred_region
      // Predicated region
      $region17: #{combo_loss_focal.1} parent=15 // pred_check
        %p129 = pneg %p46
      $region18: #{combo_loss_focal.1} parent=15 // pred_check_branch
        %131 = sbr.rel (%p129) target = $region20
      $region19: #{combo_loss_focal.1} parent=15 // pred_region
        %s132 = sadd.s32 %s15, %s16
        %p133 = scmp.lt.s32.totalorder %s132, 0
        %s134 = scalar_select %p133, %s132, 0
        %s135 = smul.u32 2, %s134
        %p136 = scmp.lt.s32.totalorder %s135, 1
        %s137 = scalar_select %p136, %s135, 1
        %s138 = smul.addr %s137, 8
        %s139 = scalar_lea.vmem %s0, %s138
        %s140 = sadd.s32 %s15, %s16
        %p141 = scmp.lt.s32.totalorder %s140, 0
        %s142 = scalar_select %p141, %s140, 0
        %s143 = smul.u32 2, %s142
      $region20: #{combo_loss_focal.1} parent=15 // pred_fallthru
        _
      // Predicated region
      $region21: #{combo_loss_focal.1} parent=15 // pred_check
        %p144 = pneg %p78
      $region22: #{combo_loss_focal.1} parent=15 // pred_check_branch
        %146 = sbr.rel (%p144) target = $region24
      $region23: #{combo_loss_focal.1} parent=15 // pred_region
        %s147 = sadd.s32 %s15, %s16
        %p148 = scmp.lt.s32.totalorder %s147, 0
        %s149 = scalar_select %p148, %s147, 0
        %s150 = smul.u32 2, %s149
        %p151 = scmp.lt.s32.totalorder %s150, 1
        %s152 = scalar_select %p151, %s150, 1
        %s153 = smul.addr %s152, 4
        %s154 = scalar_lea.vmem %s1, %s153
        %s155 = sadd.s32 %s15, %s16
        %p156 = scmp.lt.s32.totalorder %s155, 0
        %s157 = scalar_select %p156, %s155, 0
        %s158 = smul.u32 2, %s157
      $region24: #{combo_loss_focal.1} parent=15 // pred_fallthru
        _
    $region16: #{combo_loss_focal.1} parent=5 // pred_fallthru
      _
    %p159 = scmp.le.s32.totalorder 1, %s8
    %p160 = scmp.lt.s32.totalorder %s8, 3
    %p161 = pnand %p159, %p160
    %p162 = pneg %p161
    // Predicated region
    $region25: #{combo_loss_focal.1} parent=5 // pred_check
      _
    $region26: #{combo_loss_focal.1} parent=5 // pred_check_branch
      %164 = sbr.rel (%p161) target = $region28
    $region27: #{combo_loss_focal.1} parent=5 // pred_region
      %s165 = ssub.s32 %s8, 1
      %s166 = sadd.s32 %s17, %s18
      %p167 = scmp.lt.s32.totalorder %s166, 0
      %s168 = scalar_select %p167, %s166, 0
      %s169 = smul.u32 2, %s168
      %p170 = scmp.lt.s32.totalorder %s169, 1
      %s171 = scalar_select %p170, %s169, 1
      %s172 = smul.addr %s171, 8
      %s173 = scalar_lea.vmem %s0, %s172
      %p174 = pneg %p52
      %p175 = pneg %p49
      %s176 = sadd.s32 %s17, %s18
      %p177 = scmp.lt.s32.totalorder %s176, 0
      %s178 = scalar_select %p177, %s176, 0
      %s179 = smul.u32 2, %s178
      %p180 = scmp.lt.s32.totalorder %s179, 1
      %s181 = scalar_select %p180, %s179, 1
      %s182 = smul.addr %s181, 4
      %s183 = scalar_lea.vmem %s1, %s182
      %p184 = pneg %p84
      %p185 = pneg %p81
      %p186 = pneg %p110
      %p187 = pneg %p107
      %p188 = scmp.lt.s32.totalorder %s17, 1
      %s189 = scalar_select %p188, %s17, 1
      %s190 = smul.addr %s189, 6
      %s191 = smul.addr %s190, 8
      %s192 = scalar_lea.vmem %s2, %s191
      %s193 = sadd.s32 %s17, %s18
      %p194 = scmp.lt.s32.totalorder %s193, 0
      %s195 = scalar_select %p194, %s193, 0
      %s196 = smul.u32 2, %s195
      %p197 = scmp.lt.s32.totalorder %s196, 1
      %s198 = scalar_select %p197, %s196, 1
      %s199 = smul.addr %s198, 8
      %s200 = scalar_lea.vmem %s0, %s199
      %s201 = sadd.s32 %s17, %s18
      %p202 = scmp.lt.s32.totalorder %s201, 0
      %s203 = scalar_select %p202, %s201, 0
      %s204 = smul.u32 2, %s203
      %s205 = sadd.s32 %s17, %s18
      %p206 = scmp.lt.s32.totalorder %s205, 0
      %s207 = scalar_select %p206, %s205, 0
      %s208 = smul.u32 2, %s207
      %p209 = scmp.lt.s32.totalorder %s208, 1
      %s210 = scalar_select %p209, %s208, 1
      %s211 = smul.addr %s210, 4
      %s212 = scalar_lea.vmem %s1, %s211
      %s213 = sadd.s32 %s17, %s18
      %p214 = scmp.lt.s32.totalorder %s213, 0
      %s215 = scalar_select %p214, %s213, 0
      %s216 = smul.u32 2, %s215
      %p217 = scmp.lt.s32.totalorder %s17, 1
      %s218 = scalar_select %p217, %s17, 1
      %s219 = smul.addr %s218, 6
      %s220 = smul.addr %s219, 8
      %s221 = scalar_lea.vmem %s2, %s220
      %p222 = scmp.eq.s32.totalorder %s18, 0
      // Predicated region
      $region29: #{combo_loss_focal.1} parent=27 // pred_check
        %p223 = pneg %p222
      $region30: #{combo_loss_focal.1} parent=27 // pred_check_branch
        %225 = sbr.rel (%p223) target = $region32
      $region31: #{combo_loss_focal.1} parent=27 // pred_region
        %226 = vst [vmem:[%s221] sm:$0xff] 0.0
        %227 = vst [vmem:[%s221 + $0x8] sm:$0xff] 0.0
        %228 = vst [vmem:[%s221 + $0x10] sm:$0xff] 0.0
        %229 = vst [vmem:[%s221 + $0x18] sm:$0xff] 0.0
        %230 = vst [vmem:[%s221 + $0x20] sm:$0xff] 0.0
        %231 = vst [vmem:[%s221 + $0x28] sm:$0xff] 0.0
      $region32: #{combo_loss_focal.1} parent=27 // pred_fallthru
        _
      %s232 = sadd.s32 %s17, %s18
      %s233 = smul.u32 %s232, 16
      %s234 = ssub.s32 16, %s233
      %v235 = vld [vmem:[%s200] sm:$0xff]
      %v236 = vld [vmem:[%s200 + $0x8] sm:$0xff]
      %v237 = vld [vmem:[%s212] sm:$0xf]
      %v238 = vld [vmem:[%s212 + $0x4] sm:$0xf]
      %v239 = vunpack.c.l.bf16 %v237
      %v240 = vunpack.c.l.bf16 %v238
      %v241 = vlaneseq
      %v242 = vshrl.u32 %v241, 7
      %v243 = vadd.s32 %v242, 8
      %v244 = vstv %s234
      %vm245 = vcmp.lt.s32.totalorder %v242, %v244
      %vm246 = vcmp.lt.s32.totalorder %v243, %v244
      %v247 = vsel %vm245, %v235, 0.0
      %v248 = vsel %vm246, %v236, 0.0
      %v249 = vsel %vm245, %v239, 0.0
      %v250 = vsel %vm246, %v240, 0.0
      %vm251 = vcmp.gt.f32.partialorder %v249, 0.5
      %vm252 = vcmp.gt.f32.partialorder %v250, 0.5
      %v253 = vsub.f32 1.0, %v247
      %v254 = vsub.f32 1.0, %v248
      %v255 = vsel %vm251, %v247, %v253
      %v256 = vsel %vm252, %v248, %v254
      %v257 = vlog2.pop %v255
      %v258 = vmul.f32 %v257, 0.6931472
      %v259 = vlog2.pop %v256
      %v260 = vmul.f32 %v259, 0.6931472
      %v261 = vmax.f32 %v258, -100.0
      %v262 = vmax.f32 %v260, -100.0
      %v263 = vsub.f32 0.0, %v261
      %v264 = vsub.f32 0.0, %v262
      %v265 = vmul.f32 %v249, %v247
      %v266 = vmul.f32 %v250, %v248
      %v267 = vld [vmem:[%s221] sm:$0xff]
      %v268 = vadd.f32 %v249, %v250
      %v269 = vadd.f32 %v267, %v268
      %270 = vst [vmem:[%s221] sm:$0xff] %v269
      %s271 = scalar_lea.vmem %s221, 8
      %v272 = vld [vmem:[%s271] sm:$0xff]
      %v273 = vadd.f32 %v263, %v264
      %v274 = vadd.f32 %v272, %v273
      %275 = vst [vmem:[%s271] sm:$0xff] %v274
      %s276 = scalar_lea.vmem %s221, 16
      %v277 = vld [vmem:[%s276] sm:$0xff]
      %v278 = vmul.f32 %v249, %v263
      %v279 = vmul.f32 %v250, %v264
      %v280 = vadd.f32 %v278, %v279
      %v281 = vadd.f32 %v277, %v280
      %282 = vst [vmem:[%s276] sm:$0xff] %v281
      %s283 = scalar_lea.vmem %s221, 24
      %v284 = vld [vmem:[%s283] sm:$0xff]
      %v285 = vadd.f32 %v265, %v266
      %v286 = vadd.f32 %v284, %v285
      %287 = vst [vmem:[%s283] sm:$0xff] %v286
      %s288 = scalar_lea.vmem %s221, 32
      %v289 = vld [vmem:[%s288] sm:$0xff]
      %v290 = vsub.f32 %v249, %v265
      %v291 = vsub.f32 %v250, %v266
      %v292 = vadd.f32 %v290, %v291
      %v293 = vadd.f32 %v289, %v292
      %294 = vst [vmem:[%s288] sm:$0xff] %v293
      %s295 = scalar_lea.vmem %s221, 40
      %v296 = vld [vmem:[%s295] sm:$0xff]
      %v297 = vsub.f32 %v247, %v265
      %v298 = vsub.f32 %v248, %v266
      %v299 = vadd.f32 %v297, %v298
      %v300 = vadd.f32 %v296, %v299
      %301 = vst [vmem:[%s295] sm:$0xff] %v300
      %p302 = scmp.lt.s32.totalorder %s17, 1
      %s303 = scalar_select %p302, %s17, 1
      %s304 = smul.addr %s303, 6
      %s305 = smul.addr %s304, 8
      %s306 = scalar_lea.vmem %s2, %s305
      // Predicated region
      $region33: #{combo_loss_focal.1} parent=27 // pred_check
        %p307 = pneg %p107
      $region34: #{combo_loss_focal.1} parent=27 // pred_check_branch
        %309 = sbr.rel (%p307) target = $region36
      $region35: #{combo_loss_focal.1} parent=27 // pred_region
        _
      $region36: #{combo_loss_focal.1} parent=27 // pred_fallthru
        _
    $region28: #{combo_loss_focal.1} parent=5 // pred_fallthru
      _
    %p310 = scmp.le.s32.totalorder 2, %s8
    // Predicated region
    $region37: #{combo_loss_focal.1} parent=5 // pred_check
      %p311 = pneg %p310
    $region38: #{combo_loss_focal.1} parent=5 // pred_check_branch
      %313 = sbr.rel (%p311) target = $region40
    $region39: #{combo_loss_focal.1} parent=5 // pred_region
      %s314 = ssub.s32 %s8, 2
      // Predicated region
      $region41: #{combo_loss_focal.1} parent=39 // pred_check
        %p315 = pneg %p113
      $region42: #{combo_loss_focal.1} parent=39 // pred_check_branch
        %317 = sbr.rel (%p315) target = $region44
      $region43: #{combo_loss_focal.1} parent=39 // pred_region
        %p318 = scmp.lt.s32.totalorder %s19, 1
        %s319 = scalar_select %p318, %s19, 1
        %s320 = smul.addr %s319, 6
        %s321 = smul.addr %s320, 8
        %s322 = scalar_lea.vmem %s2, %s321
      $region44: #{combo_loss_focal.1} parent=39 // pred_fallthru
        _
    $region40: #{combo_loss_focal.1} parent=5 // pred_fallthru
      _
  $region6: #{combo_loss_focal.1} parent=0 // loop_footer
    %s12 = sadd.s32 1, %s8
  $region7: #{combo_loss_focal.1} parent=0 // loop_footer_branch
    %7 = sbr.rel target = $region3
  $region8: #{combo_loss_focal.1} parent=0 // loop_exit
    _

</llo_original>
